<compile_context>
chip_gen: v6e
topology: v6e:2x2x1
jax: 0.10.0
libtpu: 0.0.40
codegen_flags: <defaults>
</compile_context>

<pallas_src>
import functools

import jax
import jax.numpy as jnp
from jax.experimental import pallas as pl
from jax.experimental.pallas import tpu as pltpu


def _round_up(n: int, m: int) -> int:
    return ((n + m - 1) // m) * m


def dqn_kernel(x_ref, w1_ref, b1_ref, w2_ref, b2_ref, o_ref):
    # Layer 1: Linear + ReLU.  MXU matmul with f32 accumulation, bias-add/ReLU in f32 (VPU).
    h = jnp.dot(x_ref[...], w1_ref[...], preferred_element_type=jnp.float32)
    h = jnp.maximum(h + b1_ref[...].astype(jnp.float32), 0.0)   # (tb, 128) lane-dense
    # Layer 2: Linear.  Cast activations to the weight dtype (no-op in pure f32).
    out = jnp.dot(h.astype(w2_ref.dtype), w2_ref[...],
                  preferred_element_type=jnp.float32)
    o_ref[...] = (out + b2_ref[...].astype(jnp.float32)).astype(o_ref.dtype)


def pad_dqn_params(w1, b1, w2, b2, *, lane: int = 128):
    """One-time lane-dense layout of the (static) parameters.

    hidden (64) is zero-padded to 128 so the intermediate activation is full-lane; the
    padded hidden columns are exact zeros after ReLU and contribute nothing to layer 2.
    The narrow output_dim is left as-is (it maps to the full array dim of the output).
    """
    hidden = w1.shape[1]
    hidden_p = _round_up(max(hidden, lane), lane)
    w1_p = jnp.pad(w1, ((0, 0), (0, hidden_p - hidden)))
    b1_p = jnp.pad(b1, ((0, 0), (0, hidden_p - hidden)))
    w2_p = jnp.pad(w2, ((0, hidden_p - hidden), (0, 0)))
    return w1_p, b1_p, w2_p, b2


@functools.partial(jax.jit, static_argnames=("tile_b",))
def dqn_forward(x, w1_p, b1_p, w2_p, b2, *, tile_b: int = 4096):
    """Fused 2-layer MLP forward, gridded over the batch dimension.

    x:    (B, input_dim)          f32 (or bf16)
    w1_p: (input_dim, 128)        b1_p: (1, 128)        -- pre-padded via pad_dqn_params
    w2_p: (128, output_dim)       b2:   (1, output_dim)
    returns (B, output_dim) f32
    """
    B, input_dim = x.shape
    hidden_p = w1_p.shape[1]
    out_dim = w2_p.shape[1]

    # Batch tile: sublane-aligned, as big as useful, but keep >= 2 grid steps when the
    # batch is large enough so v7x's two TensorCores both get work.
    tb = max(8, min(_round_up(tile_b, 8), _round_up(B, 8)))
    if B > 8:
        tb = min(tb, max(8, _round_up(pl.cdiv(B, 2), 8)))
    grid = (pl.cdiv(B, tb),)

    flops = 2 * B * (input_dim * hidden_p + hidden_p * out_dim)
    bytes_accessed = (
        B * (input_dim + out_dim) * 4
        + (w1_p.size + b1_p.size + w2_p.size + b2.size) * 4
    )

    return pl.pallas_call(
        dqn_kernel,
        out_shape=jax.ShapeDtypeStruct((B, out_dim), jnp.float32),
        grid=grid,
        in_specs=[
            pl.BlockSpec((tb, input_dim), lambda i: (i, 0)),        # x: blocked over batch
            pl.BlockSpec((input_dim, hidden_p), lambda i: (0, 0)),  # w1: VMEM-resident
            pl.BlockSpec((1, hidden_p), lambda i: (0, 0)),          # b1: VMEM-resident
            pl.BlockSpec((hidden_p, out_dim), lambda i: (0, 0)),    # w2: VMEM-resident
            pl.BlockSpec((1, out_dim), lambda i: (0, 0)),           # b2: VMEM-resident
        ],
        out_specs=pl.BlockSpec((tb, out_dim), lambda i: (i, 0)),    # narrow, final-shape store
        compiler_params=pltpu.CompilerParams(
            dimension_semantics=("parallel",),
        ),
        cost_estimate=pl.CostEstimate(
            flops=flops, transcendentals=0, bytes_accessed=bytes_accessed
        ),
    )(x, w1_p, b1_p, w2_p, b2)


def init_dqn_params(key, input_dim, output_dim, hidden=64):
    """Deterministic init mimicking PyTorch nn.Linear default: U(-1/sqrt(fan_in), 1/sqrt(fan_in))."""
    k1, k2, k3, k4 = jax.random.split(key, 4)
    bound1 = 1.0 / jnp.sqrt(jnp.float32(input_dim))
    bound2 = 1.0 / jnp.sqrt(jnp.float32(hidden))
    w1 = jax.random.uniform(k1, (input_dim, hidden), jnp.float32, -bound1, bound1)
    b1 = jax.random.uniform(k2, (1, hidden), jnp.float32, -bound1, bound1)
    w2 = jax.random.uniform(k3, (hidden, output_dim), jnp.float32, -bound2, bound2)
    b2 = jax.random.uniform(k4, (1, output_dim), jnp.float32, -bound2, bound2)
    return w1, b1, w2, b2


if __name__ == "__main__":
    key = jax.random.PRNGKey(0)
    kx, kp = jax.random.split(key)

    input_dim = 16   # small state vector
    output_dim = 4   # number of discrete actions
    hidden = 64

    w1, b1, w2, b2 = init_dqn_params(kp, input_dim, output_dim, hidden)
    params = pad_dqn_params(w1, b1, w2, b2)   # one-time static layout, outside the forward

    # Case 1: tile-aligned batch.
    batch = 32
    x = jax.random.normal(kx, (batch, input_dim), jnp.float32)
    ref = jnp.maximum(x @ w1 + b1, 0.0) @ w2 + b2
    out = jax.block_until_ready(dqn_forward(x, *params))
    assert out.shape == (batch, output_dim)
    assert jnp.allclose(out, ref, atol=1e-5, rtol=1e-5)

    # Case 2: ragged batch (exercises the masked partial final block -- no wrapper pad/slice).
    batch2 = 37
    x2 = jax.random.normal(jax.random.PRNGKey(1), (batch2, input_dim), jnp.float32)
    ref2 = jnp.maximum(x2 @ w1 + b1, 0.0) @ w2 + b2
    out2 = jax.block_until_ready(dqn_forward(x2, *params))
    assert out2.shape == (batch2, output_dim)
    assert jnp.allclose(out2, ref2, atol=1e-5, rtol=1e-5)

    print("KERNEL_OK")
</pallas_src>

<mosaic_0001>
module attributes {stable_mosaic.version = 11 : i64} {
  func.func @dqn_kernel(%arg0: i32, %arg1: memref<16x16xf32, #tpu.memory_space<vmem>>, %arg2: memref<16x128xf32, #tpu.memory_space<vmem>>, %arg3: memref<1x128xf32, #tpu.memory_space<vmem>>, %arg4: memref<128x4xf32, #tpu.memory_space<vmem>>, %arg5: memref<1x4xf32, #tpu.memory_space<vmem>>, %arg6: memref<16x4xf32, #tpu.memory_space<vmem>>) attributes {dimension_semantics = [#tpu.dimension_semantics<parallel>], iteration_bounds = array<i64: 2>, scalar_prefetch = 0 : i64, scratch_operands = 0 : i64, tpu.core_type = #tpu.core_type<tc>, window_params = [{transform_indices = @transform_0, window_bounds = array<i64: 16, 16>}, {pipeline_mode = #tpu.pipeline_mode<synchronous>, transform_indices = @transform_1, window_bounds = array<i64: 16, 128>}, {pipeline_mode = #tpu.pipeline_mode<synchronous>, transform_indices = @transform_2, window_bounds = array<i64: 1, 128>}, {pipeline_mode = #tpu.pipeline_mode<synchronous>, transform_indices = @transform_3, window_bounds = array<i64: 128, 4>}, {pipeline_mode = #tpu.pipeline_mode<synchronous>, transform_indices = @transform_4, window_bounds = array<i64: 1, 4>}, {transform_indices = @transform_5, window_bounds = array<i64: 16, 4>}]} {
    %c0 = arith.constant 0 : index
    %c0_0 = arith.constant 0 : index
    %0 = vector.load %arg1[%c0, %c0_0] : memref<16x16xf32, #tpu.memory_space<vmem>>, vector<16x16xf32>
    %c0_1 = arith.constant 0 : index
    %c0_2 = arith.constant 0 : index
    %1 = vector.load %arg2[%c0_1, %c0_2] : memref<16x128xf32, #tpu.memory_space<vmem>>, vector<16x128xf32>
    %cst = arith.constant dense<0.000000e+00> : vector<16x128xf32>
    %2 = tpu.matmul %0, %1, %cst {dimension_numbers = #tpu.dot_dimension_numbers<[1], [0], [0], [1], [0, 0, 1, 1], [], []>} : vector<16x16xf32>, vector<16x128xf32>, vector<16x128xf32> -> vector<16x128xf32>
    %c0_3 = arith.constant 0 : index
    %c0_4 = arith.constant 0 : index
    %3 = vector.load %arg3[%c0_3, %c0_4] : memref<1x128xf32, #tpu.memory_space<vmem>>, vector<1x128xf32>
    %4 = vector.broadcast %3 : vector<1x128xf32> to vector<16x128xf32>
    %5 = arith.addf %2, %4 : vector<16x128xf32>
    %cst_5 = arith.constant 0.000000e+00 : f32
    %6 = vector.broadcast %cst_5 : f32 to vector<16x128xf32>
    %7 = arith.maximumf %5, %6 : vector<16x128xf32>
    %c0_6 = arith.constant 0 : index
    %c0_7 = arith.constant 0 : index
    %8 = vector.load %arg4[%c0_6, %c0_7] : memref<128x4xf32, #tpu.memory_space<vmem>>, vector<128x4xf32>
    %cst_8 = arith.constant dense<0.000000e+00> : vector<16x4xf32>
    %9 = tpu.matmul %7, %8, %cst_8 {dimension_numbers = #tpu.dot_dimension_numbers<[1], [0], [0], [1], [0, 0, 1, 1], [], []>} : vector<16x128xf32>, vector<128x4xf32>, vector<16x4xf32> -> vector<16x4xf32>
    %c0_9 = arith.constant 0 : index
    %c0_10 = arith.constant 0 : index
    %10 = vector.load %arg5[%c0_9, %c0_10] : memref<1x4xf32, #tpu.memory_space<vmem>>, vector<1x4xf32>
    %11 = vector.broadcast %10 : vector<1x4xf32> to vector<16x4xf32>
    %12 = arith.addf %9, %11 : vector<16x4xf32>
    %c0_11 = arith.constant 0 : index
    %c0_12 = arith.constant 0 : index
    %13 = vector.load %arg6[%c0_11, %c0_12] : memref<16x4xf32, #tpu.memory_space<vmem>>, vector<16x4xf32>
    tpu.vector_store %arg6[%c0_11, %c0_12], %12 {strides = array<i32>} : memref<16x4xf32, #tpu.memory_space<vmem>>, vector<16x4xf32>,
    return
  }
  func.func @transform_0(%arg0: i32) -> (i32, i32) {
    %c0_i32 = arith.constant 0 : i32
    %c0_i32_0 = arith.constant 0 : i32
    return %arg0, %c0_i32 : i32, i32
  }
  func.func @transform_1(%arg0: i32) -> (i32, i32) {
    %c0_i32 = arith.constant 0 : i32
    %c0_i32_0 = arith.constant 0 : i32
    %c0_i32_1 = arith.constant 0 : i32
    return %c0_i32, %c0_i32_0 : i32, i32
  }
  func.func @transform_2(%arg0: i32) -> (i32, i32) {
    %c0_i32 = arith.constant 0 : i32
    %c0_i32_0 = arith.constant 0 : i32
    %c0_i32_1 = arith.constant 0 : i32
    return %c0_i32, %c0_i32_0 : i32, i32
  }
  func.func @transform_3(%arg0: i32) -> (i32, i32) {
    %c0_i32 = arith.constant 0 : i32
    %c0_i32_0 = arith.constant 0 : i32
    %c0_i32_1 = arith.constant 0 : i32
    return %c0_i32, %c0_i32_0 : i32, i32
  }
  func.func @transform_4(%arg0: i32) -> (i32, i32) {
    %c0_i32 = arith.constant 0 : i32
    %c0_i32_0 = arith.constant 0 : i32
    %c0_i32_1 = arith.constant 0 : i32
    return %c0_i32, %c0_i32_0 : i32, i32
  }
  func.func @transform_5(%arg0: i32) -> (i32, i32) {
    %c0_i32 = arith.constant 0 : i32
    %c0_i32_0 = arith.constant 0 : i32
    return %arg0, %c0_i32 : i32, i32
  }
}

</mosaic_0001>

<llo_original>
// kernel: dqn_forward.1
$region0: #{dqn_forward.1}
  #allocation0 [shape = 'u32[]', space=smem, size = 0x4, offset = 0x4, fixed_abs, tag = 'smem constant byte address 0x4 - core index']
  #allocation1 [shape = 'u32[144,128]{1,0:T(1,128)}', space=vmem, size = 0x12000, scoped, tag = 'internal scratch']
  %s0 = inlined_call_operand.vmem [shape: f32[32,16], index: 0, kind: input, shape index: {}]
  %s1 = inlined_call_operand.vmem [shape: f32[16,128], index: 1, kind: input, shape index: {}]
  %s2 = inlined_call_operand.vmem [shape: f32[1,128], index: 2, kind: input, shape index: {}]
  %s3 = inlined_call_operand.vmem [shape: f32[128,4], index: 3, kind: input, shape index: {}]
  %s4 = inlined_call_operand.vmem [shape: f32[1,4], index: 4, kind: input, shape index: {}]
  %s5 = inlined_call_operand.vmem [shape: f32[32,4], index: 5, kind: output, shape index: {}]
  %s6 = sld [smem:[#allocation0]]
  $region53: #{dqn_forward.1} parent=0
    _
  %s8 = ssub.s32 1, %s6
  %s9 = scalar_select 0, %s8, %s6
  loop: start=0, step=1, limit=4
  $region2: #{dqn_forward.1} parent=0 // loop_pre_header
    _
  $region3: #{dqn_forward.1} parent=0 // loop_header
    %s11 = sphi 0, %s15
    %p12 = scmp.ge.s32.totalorder %s11, 4
    %s21 = sphi 0, %s23
    %s24 = sphi 0, %s21
    %s25 = sphi 0, %s24
    %s41 = sphi 0, %s25
    %s45 = sphi 0, %s45
    %s47 = sphi 0, %s45
    %s48 = sphi 0, %s47
    %s62 = sphi 0, %s48
    %s66 = sphi 0, %s66
    %s68 = sphi 0, %s66
    %s69 = sphi 0, %s68
    %s83 = sphi 0, %s69
    %s87 = sphi 0, %s87
    %s89 = sphi 0, %s87
    %s90 = sphi 0, %s89
    %s104 = sphi 0, %s90
    %s108 = sphi 0, %s108
    %s110 = sphi 0, %s108
    %s111 = sphi 0, %s110
    %s125 = sphi 0, %s111
    %s131 = sphi 0, %s133
    %s134 = sphi 0, %s131
    %s135 = sphi 0, %s134
    %s151 = sphi 0, %s135
  $region4: #{dqn_forward.1} parent=0 // loop_header_branch
    %14 = sbr.rel (%p12) target = $region8
  $region5: #{dqn_forward.1} parent=0 // loop_body
    %s16 = ssub.s32 %s11, 1
    %s17 = ssub.s32 %s11, 2
    %s18 = sadd.s32 %s11, 1
    %s19 = ssub.s32 %s11, %s18
    %p20 = scmp.eq.s32.totalorder %s19, 0
    %s22 = sadd.s32 %s21, 1
    %s23 = scalar_select %p20, %s21, %s22
    %p26 = pneg %p20
    %p27 = scmp.eq.s32.totalorder %s11, 1
    %p28 = por %p26, %p27
    %p29 = scmp.ne.s32.totalorder %s21, %s24
    %p30 = scmp.eq.s32.totalorder %s11, 0
    %p31 = por %p29, %p30
    %p32 = scmp.ne.s32.totalorder %s21, %s24
    %p33 = scmp.eq.s32.totalorder %s16, 1
    %p34 = por %p32, %p33
    %p35 = scmp.ne.s32.totalorder %s24, %s25
    %p36 = scmp.eq.s32.totalorder %s16, 0
    %p37 = por %p35, %p36
    %p38 = scmp.ne.s32.totalorder %s24, %s25
    %p39 = scmp.eq.s32.totalorder %s17, 1
    %p40 = por %p38, %p39
    %p42 = scmp.ne.s32.totalorder %s25, %s41
    %p43 = scmp.eq.s32.totalorder %s17, 0
    %p44 = por %p42, %p43
    %s46 = sadd.s32 %s45, 1
    %p49 = scmp.eq.s32.totalorder %s11, 1
    %p50 = scmp.ne.s32.totalorder %s45, %s47
    %p51 = scmp.eq.s32.totalorder %s11, 0
    %p52 = por %p50, %p51
    %p53 = scmp.ne.s32.totalorder %s45, %s47
    %p54 = scmp.eq.s32.totalorder %s16, 1
    %p55 = por %p53, %p54
    %p56 = scmp.ne.s32.totalorder %s47, %s48
    %p57 = scmp.eq.s32.totalorder %s16, 0
    %p58 = por %p56, %p57
    %p59 = scmp.ne.s32.totalorder %s47, %s48
    %p60 = scmp.eq.s32.totalorder %s17, 1
    %p61 = por %p59, %p60
    %p63 = scmp.ne.s32.totalorder %s48, %s62
    %p64 = scmp.eq.s32.totalorder %s17, 0
    %p65 = por %p63, %p64
    %s67 = sadd.s32 %s66, 1
    %p70 = scmp.eq.s32.totalorder %s11, 1
    %p71 = scmp.ne.s32.totalorder %s66, %s68
    %p72 = scmp.eq.s32.totalorder %s11, 0
    %p73 = por %p71, %p72
    %p74 = scmp.ne.s32.totalorder %s66, %s68
    %p75 = scmp.eq.s32.totalorder %s16, 1
    %p76 = por %p74, %p75
    %p77 = scmp.ne.s32.totalorder %s68, %s69
    %p78 = scmp.eq.s32.totalorder %s16, 0
    %p79 = por %p77, %p78
    %p80 = scmp.ne.s32.totalorder %s68, %s69
    %p81 = scmp.eq.s32.totalorder %s17, 1
    %p82 = por %p80, %p81
    %p84 = scmp.ne.s32.totalorder %s69, %s83
    %p85 = scmp.eq.s32.totalorder %s17, 0
    %p86 = por %p84, %p85
    %s88 = sadd.s32 %s87, 1
    %p91 = scmp.eq.s32.totalorder %s11, 1
    %p92 = scmp.ne.s32.totalorder %s87, %s89
    %p93 = scmp.eq.s32.totalorder %s11, 0
    %p94 = por %p92, %p93
    %p95 = scmp.ne.s32.totalorder %s87, %s89
    %p96 = scmp.eq.s32.totalorder %s16, 1
    %p97 = por %p95, %p96
    %p98 = scmp.ne.s32.totalorder %s89, %s90
    %p99 = scmp.eq.s32.totalorder %s16, 0
    %p100 = por %p98, %p99
    %p101 = scmp.ne.s32.totalorder %s89, %s90
    %p102 = scmp.eq.s32.totalorder %s17, 1
    %p103 = por %p101, %p102
    %p105 = scmp.ne.s32.totalorder %s90, %s104
    %p106 = scmp.eq.s32.totalorder %s17, 0
    %p107 = por %p105, %p106
    %s109 = sadd.s32 %s108, 1
    %p112 = scmp.eq.s32.totalorder %s11, 1
    %p113 = scmp.ne.s32.totalorder %s108, %s110
    %p114 = scmp.eq.s32.totalorder %s11, 0
    %p115 = por %p113, %p114
    %p116 = scmp.ne.s32.totalorder %s108, %s110
    %p117 = scmp.eq.s32.totalorder %s16, 1
    %p118 = por %p116, %p117
    %p119 = scmp.ne.s32.totalorder %s110, %s111
    %p120 = scmp.eq.s32.totalorder %s16, 0
    %p121 = por %p119, %p120
    %p122 = scmp.ne.s32.totalorder %s110, %s111
    %p123 = scmp.eq.s32.totalorder %s17, 1
    %p124 = por %p122, %p123
    %p126 = scmp.ne.s32.totalorder %s111, %s125
    %p127 = scmp.eq.s32.totalorder %s17, 0
    %p128 = por %p126, %p127
    %s129 = ssub.s32 %s11, %s18
    %p130 = scmp.eq.s32.totalorder %s129, 0
    %s132 = sadd.s32 %s131, 1
    %s133 = scalar_select %p130, %s131, %s132
    %p136 = pneg %p130
    %p137 = scmp.eq.s32.totalorder %s11, 1
    %p138 = por %p136, %p137
    %p139 = scmp.ne.s32.totalorder %s131, %s134
    %p140 = scmp.eq.s32.totalorder %s11, 0
    %p141 = por %p139, %p140
    %p142 = scmp.ne.s32.totalorder %s131, %s134
    %p143 = scmp.eq.s32.totalorder %s16, 1
    %p144 = por %p142, %p143
    %p145 = scmp.ne.s32.totalorder %s134, %s135
    %p146 = scmp.eq.s32.totalorder %s16, 0
    %p147 = por %p145, %p146
    %p148 = scmp.ne.s32.totalorder %s134, %s135
    %p149 = scmp.eq.s32.totalorder %s17, 1
    %p150 = por %p148, %p149
    %p152 = scmp.ne.s32.totalorder %s135, %s151
    %p153 = scmp.eq.s32.totalorder %s17, 0
    %p154 = por %p152, %p153
    %p155 = scmp.le.s32.totalorder 1, %s11
    %p156 = scmp.lt.s32.totalorder %s11, 3
    %p157 = pnand %p155, %p156
    %p158 = pneg %p157
    // Predicated region
    $region9: #{dqn_forward.1} parent=5 // pred_check
      _
    $region10: #{dqn_forward.1} parent=5 // pred_check_branch
      %160 = sbr.rel (%p157) target = $region12
    $region11: #{dqn_forward.1} parent=5 // pred_region
      %s161 = ssub.s32 %s11, 1
      // Predicated region
      $region13: #{dqn_forward.1} parent=11 // pred_check
        %p162 = pneg %p58
      $region14: #{dqn_forward.1} parent=11 // pred_check_branch
        %164 = sbr.rel (%p162) target = $region16
      $region15: #{dqn_forward.1} parent=11 // pred_region
        _
      $region16: #{dqn_forward.1} parent=11 // pred_fallthru
        _
      // Predicated region
      $region17: #{dqn_forward.1} parent=11 // pred_check
        %p165 = pneg %p79
      $region18: #{dqn_forward.1} parent=11 // pred_check_branch
        %167 = sbr.rel (%p165) target = $region20
      $region19: #{dqn_forward.1} parent=11 // pred_region
        _
      $region20: #{dqn_forward.1} parent=11 // pred_fallthru
        _
      // Predicated region
      $region21: #{dqn_forward.1} parent=11 // pred_check
        %p168 = pneg %p100
      $region22: #{dqn_forward.1} parent=11 // pred_check_branch
        %170 = sbr.rel (%p168) target = $region24
      $region23: #{dqn_forward.1} parent=11 // pred_region
        _
      $region24: #{dqn_forward.1} parent=11 // pred_fallthru
        _
      // Predicated region
      $region25: #{dqn_forward.1} parent=11 // pred_check
        %p171 = pneg %p121
      $region26: #{dqn_forward.1} parent=11 // pred_check_branch
        %173 = sbr.rel (%p171) target = $region28
      $region27: #{dqn_forward.1} parent=11 // pred_region
        _
      $region28: #{dqn_forward.1} parent=11 // pred_fallthru
        _
    $region12: #{dqn_forward.1} parent=5 // pred_fallthru
      _
    %p174 = scmp.lt.s32.totalorder %s11, 2
    // Predicated region
    $region29: #{dqn_forward.1} parent=5 // pred_check
      %p175 = pneg %p174
    $region30: #{dqn_forward.1} parent=5 // pred_check_branch
      %177 = sbr.rel (%p175) target = $region32
    $region31: #{dqn_forward.1} parent=5 // pred_region
      // Predicated region
      $region33: #{dqn_forward.1} parent=31 // pred_check
        %p178 = pneg %p31
      $region34: #{dqn_forward.1} parent=31 // pred_check_branch
        %180 = sbr.rel (%p178) target = $region36
      $region35: #{dqn_forward.1} parent=31 // pred_region
        %s181 = smul.u32 2, %s11
        %p182 = scmp.lt.s32.totalorder %s181, 3
        %s183 = scalar_select %p182, %s181, 3
        %s184 = smul.addr %s183, 8
        %s185 = scalar_lea.vmem %s0, %s184
        %s186 = smul.u32 2, %s11
      $region36: #{dqn_forward.1} parent=31 // pred_fallthru
        _
    $region32: #{dqn_forward.1} parent=5 // pred_fallthru
      _
    %p187 = scmp.le.s32.totalorder 1, %s11
    %p188 = scmp.lt.s32.totalorder %s11, 3
    %p189 = pnand %p187, %p188
    %p190 = pneg %p189
    // Predicated region
    $region37: #{dqn_forward.1} parent=5 // pred_check
      _
    $region38: #{dqn_forward.1} parent=5 // pred_check_branch
      %192 = sbr.rel (%p189) target = $region40
    $region39: #{dqn_forward.1} parent=5 // pred_region
      %s193 = ssub.s32 %s11, 1
      %s194 = smul.u32 2, %s16
      %p195 = scmp.lt.s32.totalorder %s194, 3
      %s196 = scalar_select %p195, %s194, 3
      %s197 = smul.addr %s196, 8
      %s198 = scalar_lea.vmem %s0, %s197
      %p199 = pneg %p37
      %p200 = pneg %p34
      %p201 = pneg %p58
      %p202 = pneg %p55
      %p203 = pneg %p79
      %p204 = pneg %p76
      %p205 = pneg %p100
      %p206 = pneg %p97
      %p207 = pneg %p121
      %p208 = pneg %p118
      %p209 = pneg %p147
      %p210 = pneg %p144
      %s211 = smul.u32 2, %s16
      %p212 = scmp.lt.s32.totalorder %s211, 3
      %s213 = scalar_select %p212, %s211, 3
      %s214 = smul.addr %s213, 8
      %s215 = scalar_lea.vmem %s5, %s214
      %s216 = smul.u32 2, %s16
      %p217 = scmp.lt.s32.totalorder %s216, 3
      %s218 = scalar_select %p217, %s216, 3
      %s219 = smul.addr %s218, 8
      %s220 = scalar_lea.vmem %s0, %s219
      %s221 = smul.u32 2, %s16
      %s222 = smul.u32 2, %s16
      %p223 = scmp.lt.s32.totalorder %s222, 3
      %s224 = scalar_select %p223, %s222, 3
      %s225 = smul.addr %s224, 8
      %s226 = scalar_lea.vmem %s5, %s225
      %s227 = smul.u32 2, %s16
      %v228 = vld [vmem:[%s220] sm:$0xff]
      %v229 = vld [vmem:[%s220 + $0x8] sm:$0xff]
      %v230 = vld [vmem:[%s1] sm:$0xff]
      %v231 = vld [vmem:[%s1 + $0x8] sm:$0xff]
      %v232 = vld [vmem:[%s2] sm:$0x1]
      %v234 = vlaneseq
      %v235 = vshrl.u32 %v234, 7
      %v236 = vsub.s32 0, %v235
      %v237 = vrot.slane %v232, %v236
      %vm239 = vcmask 130048
      %v241 = vsel %vm239, %v228, 0
      %v244 = vsel %vm239, %v229, 0
      %246 = vmatprep.subr.mxu0 0.0
      %247 = vmatpush1.msra.mxu0 0.0
      %248 = vmatprep.subr.mxu0 0.0
      %249 = vmatpush1.msra.mxu0 0.0
      %250 = vmatprep.subr.mxu0 0.0
      %251 = vmatpush1.msra.mxu0 0.0
      %252 = vmatprep.subr.mxu0 0.0
      %253 = vmatpush1.msra.mxu0 0.0
      %254 = vmatprep.subr.mxu0 0.0
      %255 = vmatpush1.msra.mxu0 0.0
      %256 = vmatprep.subr.mxu0 0.0
      %257 = vmatpush1.msra.mxu0 0.0
      %258 = vmatprep.subr.mxu0 0.0
      %259 = vmatpush1.msra.mxu0 0.0
      %260 = vmatprep.subr.mxu0 0.0
      %261 = vmatpush1.msra.mxu0 0.0
      %262 = vmatprep.subr.mxu0 0.0
      %263 = vmatpush1.msra.mxu0 0.0
      %264 = vmatprep.subr.mxu0 0.0
      %265 = vmatpush1.msra.mxu0 0.0
      %266 = vmatprep.subr.mxu0 0.0
      %267 = vmatpush1.msra.mxu0 0.0
      %268 = vmatprep.subr.mxu0 0.0
      %269 = vmatpush1.msra.mxu0 0.0
      %270 = vmatprep.subr.mxu0 0.0
      %271 = vmatpush1.msra.mxu0 0.0
      %272 = vmatprep.subr.mxu0 0.0
      %273 = vmatpush1.msra.mxu0 0.0
      %274 = vmatprep.subr.mxu0 0.0
      %275 = vmatpush1.msra.mxu0 %v231
      %276 = vmatprep.subr.mxu0 0.0
      %277 = vmatpush1.msra.mxu0 %v230
      %278 = vmatprep.subr.mxu0 0.0
      %279 = vmatpush2.msra.mxu0 0.0
      %280 = vmatprep.subr.mxu0 0.0
      %281 = vmatpush2.msra.mxu0 0.0
      %282 = vmatprep.subr.mxu0 0.0
      %283 = vmatpush2.msra.mxu0 0.0
      %284 = vmatprep.subr.mxu0 0.0
      %285 = vmatpush2.msra.mxu0 0.0
      %286 = vmatprep.subr.mxu0 0.0
      %287 = vmatpush2.msra.mxu0 0.0
      %288 = vmatprep.subr.mxu0 0.0
      %289 = vmatpush2.msra.mxu0 0.0
      %290 = vmatprep.subr.mxu0 0.0
      %291 = vmatpush2.msra.mxu0 0.0
      %292 = vmatprep.subr.mxu0 0.0
      %293 = vmatpush2.msra.mxu0 0.0
      %294 = vmatprep.subr.mxu0 0.0
      %295 = vmatpush2.msra.mxu0 0.0
      %296 = vmatprep.subr.mxu0 0.0
      %297 = vmatpush2.msra.mxu0 0.0
      %298 = vmatprep.subr.mxu0 0.0
      %299 = vmatpush2.msra.mxu0 0.0
      %300 = vmatprep.subr.mxu0 0.0
      %301 = vmatpush2.msra.mxu0 0.0
      %302 = vmatprep.subr.mxu0 0.0
      %303 = vmatpush2.msra.mxu0 0.0
      %304 = vmatprep.subr.mxu0 0.0
      %305 = vmatpush2.msra.mxu0 0.0
      %306 = vmatprep.subr.mxu0 0.0
      %307 = vmatpush2.msra.mxu0 0.0
      %308 = vmatprep.subr.mxu0 0.0
      %309 = vmatpush2.msra.mxu0 0.0
      %310 = vmatprep.mubr.f32.mxu0 0.0
      %311 = vmatmul.mubr.f32.gmra.mxu0 %v241
      %v312 = vpop.f32.mrf.mxu0
      %v313 = vadd.f32 %v237, %v312
      %v314 = vpop.f32.mrf.mxu0
      %315 = vmatprep.mubr.f32.mxu0 0.0
      %316 = vmatmul.mubr.f32.gmra.mxu0 %v244
      %v317 = vpop.f32.mrf.mxu0
      %v318 = vadd.f32 %v237, %v317
      %v319 = vpop.f32.mrf.mxu0
      %320 = vdwg.mxu0
      %v321 = vmax.f32 %v313, 0.0
      %v322 = vmax.f32 %v318, 0.0
      %v323 = vld [vmem:[%s3] sm:$0xff]
      %v324 = vld [vmem:[%s3 + $0x8] sm:$0xff]
      %v325 = vld [vmem:[%s3 + $0x10] sm:$0xff]
      %v326 = vld [vmem:[%s3 + $0x18] sm:$0xff]
      %v327 = vld [vmem:[%s3 + $0x20] sm:$0xff]
      %v328 = vld [vmem:[%s3 + $0x28] sm:$0xff]
      %v329 = vld [vmem:[%s3 + $0x30] sm:$0xff]
      %v330 = vld [vmem:[%s3 + $0x38] sm:$0xff]
      %v331 = vld [vmem:[%s3 + $0x40] sm:$0xff]
      %v332 = vld [vmem:[%s3 + $0x48] sm:$0xff]
      %v333 = vld [vmem:[%s3 + $0x50] sm:$0xff]
      %v334 = vld [vmem:[%s3 + $0x58] sm:$0xff]
      %v335 = vld [vmem:[%s3 + $0x60] sm:$0xff]
      %v336 = vld [vmem:[%s3 + $0x68] sm:$0xff]
      %v337 = vld [vmem:[%s3 + $0x70] sm:$0xff]
      %v338 = vld [vmem:[%s3 + $0x78] sm:$0xff]
      %v339 = vld [vmem:[%s4] sm:$0x1]
      %v341 = vlaneseq
      %v342 = vshrl.u32 %v341, 7
      %v343 = vsub.s32 0, %v342
      %v344 = vrot.slane %v339, %v343
      %346 = vmatprep.subr.mxu0 0.0
      %347 = vmatpush1.msra.mxu0 %v338
      %348 = vmatprep.subr.mxu0 0.0
      %349 = vmatpush1.msra.mxu0 %v337
      %350 = vmatprep.subr.mxu0 0.0
      %351 = vmatpush1.msra.mxu0 %v336
      %352 = vmatprep.subr.mxu0 0.0
      %353 = vmatpush1.msra.mxu0 %v335
      %354 = vmatprep.subr.mxu0 0.0
      %355 = vmatpush1.msra.mxu0 %v334
      %356 = vmatprep.subr.mxu0 0.0
      %357 = vmatpush1.msra.mxu0 %v333
      %358 = vmatprep.subr.mxu0 0.0
      %359 = vmatpush1.msra.mxu0 %v332
      %360 = vmatprep.subr.mxu0 0.0
      %361 = vmatpush1.msra.mxu0 %v331
      %362 = vmatprep.subr.mxu0 0.0
      %363 = vmatpush1.msra.mxu0 %v330
      %364 = vmatprep.subr.mxu0 0.0
      %365 = vmatpush1.msra.mxu0 %v329
      %366 = vmatprep.subr.mxu0 0.0
      %367 = vmatpush1.msra.mxu0 %v328
      %368 = vmatprep.subr.mxu0 0.0
      %369 = vmatpush1.msra.mxu0 %v327
      %370 = vmatprep.subr.mxu0 0.0
      %371 = vmatpush1.msra.mxu0 %v326
      %372 = vmatprep.subr.mxu0 0.0
      %373 = vmatpush1.msra.mxu0 %v325
      %374 = vmatprep.subr.mxu0 0.0
      %375 = vmatpush1.msra.mxu0 %v324
      %376 = vmatprep.subr.mxu0 0.0
      %377 = vmatpush1.msra.mxu0 %v323
      %378 = vmatprep.subr.mxu0 0.0
      %379 = vmatpush2.msra.mxu0 0.0
      %380 = vmatprep.subr.mxu0 0.0
      %381 = vmatpush2.msra.mxu0 0.0
      %382 = vmatprep.subr.mxu0 0.0
      %383 = vmatpush2.msra.mxu0 0.0
      %384 = vmatprep.subr.mxu0 0.0
      %385 = vmatpush2.msra.mxu0 0.0
      %386 = vmatprep.subr.mxu0 0.0
      %387 = vmatpush2.msra.mxu0 0.0
      %388 = vmatprep.subr.mxu0 0.0
      %389 = vmatpush2.msra.mxu0 0.0
      %390 = vmatprep.subr.mxu0 0.0
      %391 = vmatpush2.msra.mxu0 0.0
      %392 = vmatprep.subr.mxu0 0.0
      %393 = vmatpush2.msra.mxu0 0.0
      %394 = vmatprep.subr.mxu0 0.0
      %395 = vmatpush2.msra.mxu0 0.0
      %396 = vmatprep.subr.mxu0 0.0
      %397 = vmatpush2.msra.mxu0 0.0
      %398 = vmatprep.subr.mxu0 0.0
      %399 = vmatpush2.msra.mxu0 0.0
      %400 = vmatprep.subr.mxu0 0.0
      %401 = vmatpush2.msra.mxu0 0.0
      %402 = vmatprep.subr.mxu0 0.0
      %403 = vmatpush2.msra.mxu0 0.0
      %404 = vmatprep.subr.mxu0 0.0
      %405 = vmatpush2.msra.mxu0 0.0
      %406 = vmatprep.subr.mxu0 0.0
      %407 = vmatpush2.msra.mxu0 0.0
      %408 = vmatprep.subr.mxu0 0.0
      %409 = vmatpush2.msra.mxu0 0.0
      %410 = vmatprep.mubr.f32.mxu0 0.0
      %411 = vmatmul.mubr.f32.gmra.mxu0 %v321
      %v412 = vpop.f32.mrf.mxu0
      %v413 = vadd.f32 %v344, %v412
      %v414 = vpop.f32.mrf.mxu0
      %415 = vmatprep.mubr.f32.mxu0 0.0
      %416 = vmatmul.mubr.f32.gmra.mxu0 %v322
      %v417 = vpop.f32.mrf.mxu0
      %v418 = vadd.f32 %v344, %v417
      %v419 = vpop.f32.mrf.mxu0
      %420 = vdwg.mxu0
      %vm421 = vcmask 31744
      %422 = vst.msk [vmem:[%s226] sm:$0xff] %vm421, %v413
      %423 = vst.msk [vmem:[%s226 + $0x8] sm:$0xff] %vm421, %v418
      %s424 = smul.u32 2, %s16
      %p425 = scmp.lt.s32.totalorder %s424, 3
      %s426 = scalar_select %p425, %s424, 3
      %s427 = smul.addr %s426, 8
      %s428 = scalar_lea.vmem %s5, %s427
      // Predicated region
      $region41: #{dqn_forward.1} parent=39 // pred_check
        %p429 = pneg %p144
      $region42: #{dqn_forward.1} parent=39 // pred_check_branch
        %431 = sbr.rel (%p429) target = $region44
      $region43: #{dqn_forward.1} parent=39 // pred_region
        %s432 = smul.u32 2, %s16
      $region44: #{dqn_forward.1} parent=39 // pred_fallthru
        _
    $region40: #{dqn_forward.1} parent=5 // pred_fallthru
      _
    %p433 = scmp.le.s32.totalorder 2, %s11
    // Predicated region
    $region45: #{dqn_forward.1} parent=5 // pred_check
      %p434 = pneg %p433
    $region46: #{dqn_forward.1} parent=5 // pred_check_branch
      %436 = sbr.rel (%p434) target = $region48
    $region47: #{dqn_forward.1} parent=5 // pred_region
      %s437 = ssub.s32 %s11, 2
      // Predicated region
      $region49: #{dqn_forward.1} parent=47 // pred_check
        %p438 = pneg %p150
      $region50: #{dqn_forward.1} parent=47 // pred_check_branch
        %440 = sbr.rel (%p438) target = $region52
      $region51: #{dqn_forward.1} parent=47 // pred_region
        %s441 = smul.u32 2, %s17
        %p442 = scmp.lt.s32.totalorder %s441, 3
        %s443 = scalar_select %p442, %s441, 3
        %s444 = smul.addr %s443, 8
        %s445 = scalar_lea.vmem %s5, %s444
      $region52: #{dqn_forward.1} parent=47 // pred_fallthru
        _
    $region48: #{dqn_forward.1} parent=5 // pred_fallthru
      _
  $region6: #{dqn_forward.1} parent=0 // loop_footer
    %s15 = sadd.s32 1, %s11
  $region7: #{dqn_forward.1} parent=0 // loop_footer_branch
    %10 = sbr.rel target = $region3
  $region8: #{dqn_forward.1} parent=0 // loop_exit
    _

</llo_original>
